<compile_context>
chip_gen: v7x
topology: tpu7x:2x2x1
jax: 0.10.0
libtpu: 0.0.40
codegen_flags: <defaults>
</compile_context>

<pallas_src>
import functools
import numpy as np

import jax
import jax.numpy as jnp
from jax import lax
from jax.experimental import pallas as pl
from jax.experimental.pallas import tpu as pltpu


# ---------------------------------------------------------------------------
# small helpers
# ---------------------------------------------------------------------------
@functools.lru_cache(maxsize=None)
def _vmem_limit_bytes():
    # generation-aware VMEM budget: ~3/4 of physical capacity, capped at 100 MiB.
    cap = 64 * 1024 * 1024
    try:
        info = pltpu.get_tpu_info()
        cap = int(getattr(info, "vmem_capacity_bytes", cap))
    except Exception:
        pass
    return int(min(cap * 3 // 4, 100 * 1024 * 1024))


def _cparams(dim_sem):
    return pltpu.CompilerParams(
        dimension_semantics=dim_sem,
        vmem_limit_bytes=_vmem_limit_bytes(),
    )


def _tile_m(M, block_m):
    # row tile: either the full extent (always legal) or a multiple-of-8 tile < M
    if M <= block_m:
        return M
    return max(8, (block_m // 8) * 8)


# ---------------------------------------------------------------------------
# Tiled linear:  y = x @ W + b          (x: (M,K) tiled over M, W resident)
# ---------------------------------------------------------------------------
def _linear_kernel(x_ref, w_ref, b_ref, o_ref):
    x = x_ref[...].astype(jnp.bfloat16)
    y = jnp.dot(x, w_ref[...], preferred_element_type=jnp.float32)
    y = y + b_ref[...].astype(jnp.float32)
    o_ref[...] = y.astype(o_ref.dtype)


def pallas_linear(x2d, w, b, block_m=512, out_dtype=None):
    M, K = x2d.shape
    Nout = w.shape[1]
    tm = _tile_m(M, block_m)
    out_dtype = x2d.dtype if out_dtype is None else out_dtype
    return pl.pallas_call(
        _linear_kernel,
        out_shape=jax.ShapeDtypeStruct((M, Nout), out_dtype),
        grid=(pl.cdiv(M, tm),),
        in_specs=[
            pl.BlockSpec((tm, K), lambda i: (i, 0)),
            pl.BlockSpec((K, Nout), lambda i: (0, 0)),
            pl.BlockSpec((1, Nout), lambda i: (0, 0)),
        ],
        out_specs=pl.BlockSpec((tm, Nout), lambda i: (i, 0)),
        compiler_params=_cparams(("parallel",)),
    )(x2d, w.astype(jnp.bfloat16), b.reshape(1, Nout))


# ---------------------------------------------------------------------------
# Tiled fused n-layer MLP (ReLU between all but the last layer)
# used for ref_point_head (2 -> C -> C -> C) and query_scale (C -> C -> C)
# ---------------------------------------------------------------------------
@functools.lru_cache(maxsize=None)
def _make_mlp_kernel(n_layers):
    def kernel(*refs):
        x_ref, o_ref = refs[0], refs[-1]
        x = x_ref[...].astype(jnp.float32)
        for i in range(n_layers):
            w = refs[1 + 2 * i][...]
            b = refs[2 + 2 * i][...].astype(jnp.float32)
            fin = w.shape[0]
            if fin <= 4:
                # degenerate contraction (the 2-d reference-point input): keep it on the VPU
                y = x[:, 0:1] * w[0:1, :].astype(jnp.float32)
                for k in range(1, fin):
                    y = y + x[:, k:k + 1] * w[k:k + 1, :].astype(jnp.float32)
            else:
                y = jnp.dot(x.astype(jnp.bfloat16), w.astype(jnp.bfloat16),
                            preferred_element_type=jnp.float32)
            x = y + b
            if i < n_layers - 1:
                x = jnp.maximum(x, 0.0)
        o_ref[...] = x.astype(o_ref.dtype)
    return kernel


def pallas_mlp(x2d, Ws, bs, block_m=512):
    M, K = x2d.shape
    Nout = Ws[-1].shape[1]
    tm = _tile_m(M, block_m)
    in_specs = [pl.BlockSpec((tm, K), lambda i: (i, 0))]
    args = [x2d]
    for W, b in zip(Ws, bs):
        in_specs.append(pl.BlockSpec(W.shape, lambda i: (0, 0)))
        in_specs.append(pl.BlockSpec((1, W.shape[1]), lambda i: (0, 0)))
        args.append(W)
        args.append(b.reshape(1, W.shape[1]))
    return pl.pallas_call(
        _make_mlp_kernel(len(Ws)),
        out_shape=jax.ShapeDtypeStruct((M, Nout), x2d.dtype),
        grid=(pl.cdiv(M, tm),),
        in_specs=in_specs,
        out_specs=pl.BlockSpec((tm, Nout), lambda i: (i, 0)),
        compiler_params=_cparams(("parallel",)),
    )(*args)


# ---------------------------------------------------------------------------
# Fused decoder layer kernel:
#   q       = tgt + query_pos
#   proj    = q @ [Woff_x | Woff_y | Wattn] + b                (one MXU pass)
#   px,py   = ref * (W_l,H_l) + offset - 0.5                   (grid_sample align_corners=False)
#   attn    = per-head softmax over (levels*points), folded into bilinear tap weights
#   gather  = per-level one-hot matrix (tq, HW_l) -> bf16 MXU matmul against bf16 value
#   x1      = LN1(tgt + gather @ Wout + bout)
#   out     = LN2(x1 + W2 @ relu(W1 @ x1))
# grid = (N, nq_tiles); value block (T_pad, C) resident per batch element.
# ---------------------------------------------------------------------------
@functools.lru_cache(maxsize=None)
def _make_fused_layer_kernel(spatial_shapes, level_start_pad, level_size_pad,
                             n_heads, n_points, head_dim):
    H, P, Dh = n_heads, n_points, head_dim
    L = len(spatial_shapes)
    LP = L * P
    HLP = H * LP

    def kernel(tgt_ref, qpos_ref, ref_ref, scale_ref, val_ref,
               wcat_ref, bcat_ref, wout_ref, bout_ref, g1_ref, be1_ref,
               w1_ref, fb1_ref, w2_ref, fb2_ref, g2_ref, be2_ref, o_ref):
        tgt = tgt_ref[...].astype(jnp.float32)                    # (tq, C)
        TQ = tgt.shape[0]

        # ---- fused offset / attention-logit projection ----
        q = (tgt + qpos_ref[...].astype(jnp.float32)).astype(jnp.bfloat16)
        proj = jnp.dot(q, wcat_ref[...], preferred_element_type=jnp.float32)
        proj = proj + bcat_ref[...]
        off_x = proj[:, 0:HLP]
        off_y = proj[:, HLP:2 * HLP]
        logits = proj[:, 2 * HLP:3 * HLP]

        scale = scale_ref[...]                                    # (2, HLP): [W_l ; H_l]
        Wf = scale[0:1, :]
        Hf = scale[1:2, :]
        Wi = Wf.astype(jnp.int32)
        Hi = Hf.astype(jnp.int32)

        rp = ref_ref[...].astype(jnp.float32)                     # (tq, 2)
        # loc = ref + off / size ;  pixel = loc*size - 0.5  ==  ref*size + off - 0.5
        px = rp[:, 0:1] * Wf + off_x - 0.5
        py = rp[:, 1:2] * Hf + off_y - 0.5
        x0f = jnp.floor(px)
        y0f = jnp.floor(py)
        tx = px - x0f
        ty = py - y0f
        x0 = x0f.astype(jnp.int32)
        y0 = y0f.astype(jnp.int32)

        vx0 = (x0 >= 0) & (x0 < Wi)
        vx1 = (x0 >= -1) & (x0 + 1 < Wi)
        vy0 = (y0 >= 0) & (y0 < Hi)
        vy1 = (y0 >= -1) & (y0 + 1 < Hi)

        # bilinear tap weights with zero padding outside the map
        w00 = jnp.where(vx0 & vy0, (1.0 - tx) * (1.0 - ty), 0.0)
        w01 = jnp.where(vx1 & vy0, tx * (1.0 - ty), 0.0)
        w10 = jnp.where(vx0 & vy1, (1.0 - tx) * ty, 0.0)
        w11 = jnp.where(vx1 & vy1, tx * ty, 0.0)
        base = y0 * Wi + x0                                       # flattened top-left index

        # per-head softmax over levels*points, folded into the tap weights (no concatenate)
        w00h, w01h, w10h, w11h = [], [], [], []
        for h in range(H):
            sl = slice(h * LP, (h + 1) * LP)
            lg = logits[:, sl]
            m = jnp.max(lg, axis=-1, keepdims=True)
            e = jnp.exp(lg - m)
            a = e / jnp.sum(e, axis=-1, keepdims=True)
            w00h.append(w00[:, sl] * a)
            w01h.append(w01[:, sl] * a)
            w10h.append(w10[:, sl] * a)
            w11h.append(w11[:, sl] * a)

        head_out = [jnp.zeros((TQ, Dh), jnp.float32) for _ in range(H)]
        for l, (Hl, Wl) in enumerate(spatial_shapes):
            HWp = level_size_pad[l]                               # 16-aligned level size
            start = level_start_pad[l]                            # 16-aligned level start
            v_l = val_ref[start:start + HWp, :]                   # bf16 (HWp, C), aligned slice
            col = lax.broadcasted_iota(jnp.int32, (1, HWp), 1)
            for h in range(H):
                A = jnp.zeros((TQ, HWp), jnp.float32)
                for p in range(P):
                    c = (h * L + l) * P + p                       # global (h,l,p) column
                    ch = l * P + p                                # within-head column
                    d = col - base[:, c:c + 1]                    # (tq, HWp)
                    A = (A
                         + jnp.where(d == 0, w00h[h][:, ch:ch + 1],
                                     jnp.where(d == 1, w01h[h][:, ch:ch + 1], 0.0))
                         + jnp.where(d == Wl, w10h[h][:, ch:ch + 1],
                                     jnp.where(d == Wl + 1, w11h[h][:, ch:ch + 1], 0.0)))
                # bf16 gather matmul on the MXU, f32 accumulation
                head_out[h] = head_out[h] + jnp.dot(
                    A.astype(jnp.bfloat16), v_l[:, h * Dh:(h + 1) * Dh],
                    preferred_element_type=jnp.float32)

        attn_out = jnp.concatenate(head_out, axis=-1)             # (tq, C)

        # ---- output projection + residual + LayerNorm1 ----
        y = jnp.dot(attn_out.astype(jnp.bfloat16), wout_ref[...],
                    preferred_element_type=jnp.float32) + bout_ref[...]
        s = tgt + y
        mu = jnp.mean(s, axis=-1, keepdims=True)
        var = jnp.mean((s - mu) * (s - mu), axis=-1, keepdims=True)
        x1 = (s - mu) * lax.rsqrt(var + 1e-5)
        x1 = x1 * g1_ref[...] + be1_ref[...]

        # ---- FFN + residual + LayerNorm2 (dropouts are identity in eval mode) ----
        hdn = jnp.dot(x1.astype(jnp.bfloat16), w1_ref[...],
                      preferred_element_type=jnp.float32) + fb1_ref[...]
        hdn = jnp.maximum(hdn, 0.0)
        y2 = jnp.dot(hdn.astype(jnp.bfloat16), w2_ref[...],
                     preferred_element_type=jnp.float32) + fb2_ref[...]
        s2 = x1 + y2
        mu2 = jnp.mean(s2, axis=-1, keepdims=True)
        var2 = jnp.mean((s2 - mu2) * (s2 - mu2), axis=-1, keepdims=True)
        x2 = (s2 - mu2) * lax.rsqrt(var2 + 1e-5)
        o_ref[...] = (x2 * g2_ref[...] + be2_ref[...]).astype(o_ref.dtype)

    return kernel


def pallas_decoder_layer(lp, tgt, query_pos, reference_points, value, col_scale,
                         spatial_shapes, level_start_pad, level_size_pad,
                         n_heads, n_points, block_q=128):
    N, nq, C = tgt.shape
    Tp = value.shape[1]
    F = lp["W1"].shape[1]
    HLP = col_scale.shape[1]
    Dh = C // n_heads
    tq = _tile_m(nq, block_q)
    kernel = _make_fused_layer_kernel(tuple(spatial_shapes), tuple(level_start_pad),
                                      tuple(level_size_pad), n_heads, n_points, Dh)
    return pl.pallas_call(
        kernel,
        out_shape=jax.ShapeDtypeStruct((N, nq, C), tgt.dtype),
        grid=(N, pl.cdiv(nq, tq)),
        in_specs=[
            pl.BlockSpec((None, tq, C), lambda n, qi: (n, qi, 0)),     # tgt
            pl.BlockSpec((None, tq, C), lambda n, qi: (n, qi, 0)),     # query_pos
            pl.BlockSpec((None, tq, 2), lambda n, qi: (n, qi, 0)),     # reference points
            pl.BlockSpec((2, HLP), lambda n, qi: (0, 0)),              # per-column (W_l, H_l)
            pl.BlockSpec((None, Tp, C), lambda n, qi: (n, 0, 0)),      # bf16 value (per batch)
            pl.BlockSpec((C, 3 * HLP), lambda n, qi: (0, 0)),          # fused proj weight
            pl.BlockSpec((1, 3 * HLP), lambda n, qi: (0, 0)),
            pl.BlockSpec((C, C), lambda n, qi: (0, 0)),                # Wout
            pl.BlockSpec((1, C), lambda n, qi: (0, 0)),
            pl.BlockSpec((1, C), lambda n, qi: (0, 0)),                # ln1 gamma
            pl.BlockSpec((1, C), lambda n, qi: (0, 0)),                # ln1 beta
            pl.BlockSpec((C, F), lambda n, qi: (0, 0)),                # W1
            pl.BlockSpec((1, F), lambda n, qi: (0, 0)),
            pl.BlockSpec((F, C), lambda n, qi: (0, 0)),                # W2
            pl.BlockSpec((1, C), lambda n, qi: (0, 0)),
            pl.BlockSpec((1, C), lambda n, qi: (0, 0)),                # ln2 gamma
            pl.BlockSpec((1, C), lambda n, qi: (0, 0)),                # ln2 beta
        ],
        out_specs=pl.BlockSpec((None, tq, C), lambda n, qi: (n, qi, 0)),
        compiler_params=_cparams(("parallel", "parallel")),            # both axes independent
    )(tgt, query_pos, reference_points, col_scale, value,
      lp["Wcat"].astype(jnp.bfloat16), lp["bcat"].reshape(1, 3 * HLP),
      lp["Wout"].astype(jnp.bfloat16), lp["bout"].reshape(1, C),
      lp["ln1_g"].reshape(1, C), lp["ln1_b"].reshape(1, C),
      lp["W1"].astype(jnp.bfloat16), lp["b1"].reshape(1, F),
      lp["W2"].astype(jnp.bfloat16), lp["b2"].reshape(1, C),
      lp["ln2_g"].reshape(1, C), lp["ln2_b"].reshape(1, C))


# ---------------------------------------------------------------------------
# level padding (16-aligned starts/sizes so in-kernel value slices are tile-aligned
# for both f32 and packed bf16 layouts) and per-column level-size table
# ---------------------------------------------------------------------------
def _pad_src_levels(src, spatial_shapes, align=16):
    sizes = [h * w for (h, w) in spatial_shapes]
    padded = [((s + align - 1) // align) * align for s in sizes]
    starts, acc = [], 0
    for p in padded:
        starts.append(acc)
        acc += p
    if padded == sizes:
        return src, tuple(starts), tuple(padded)
    pieces, off = [], 0
    for s, p in zip(sizes, padded):
        piece = src[:, off:off + s, :]
        if p > s:
            piece = jnp.pad(piece, ((0, 0), (0, p - s), (0, 0)))
        pieces.append(piece)
        off += s
    return jnp.concatenate(pieces, axis=1), tuple(starts), tuple(padded)


def _build_col_scale(spatial_shapes, n_heads, n_points):
    L = len(spatial_shapes)
    HLP = n_heads * L * n_points
    cs = np.zeros((2, HLP), np.float32)
    for h in range(n_heads):
        for l, (Hl, Wl) in enumerate(spatial_shapes):
            for p in range(n_points):
                c = (h * L + l) * n_points + p
                cs[0, c] = float(Wl)
                cs[1, c] = float(Hl)
    return jnp.asarray(cs)


# ---------------------------------------------------------------------------
# Parameter init (deterministic, synthetic)
# ---------------------------------------------------------------------------
def init_params(key, d_model, d_ffn, n_levels, n_heads, n_points, num_layers):
    C = d_model
    HLP = n_heads * n_levels * n_points

    def lin(k, fin, fout, scale=1.0):
        return scale * jax.random.normal(k, (fin, fout), jnp.float32) / jnp.sqrt(fin)

    keys = jax.random.split(key, 2 + num_layers)

    k = jax.random.split(keys[0], 3)
    ref_head_W = [lin(k[0], 2, C), lin(k[1], C, C), lin(k[2], C, C)]
    ref_head_b = [jnp.zeros((C,), jnp.float32) for _ in range(3)]

    k = jax.random.split(keys[1], 2)
    qscale_W = [lin(k[0], C, C), lin(k[1], C, C)]
    qscale_b = [jnp.zeros((C,), jnp.float32) for _ in range(2)]

    # permutation so offset features come out as [all-x | all-y] in (head, level, point) order
    perm = np.concatenate([np.arange(HLP) * 2, np.arange(HLP) * 2 + 1])

    layers = []
    for li in range(num_layers):
        kk = jax.random.split(keys[2 + li], 8)
        Woff = lin(kk[0], C, HLP * 2, scale=0.1)
        boff = 0.5 * jax.random.normal(kk[1], (HLP * 2,), jnp.float32)
        Wattn = lin(kk[3], C, HLP)
        battn = jnp.zeros((HLP,), jnp.float32)
        # fused (C, 3*HLP) projection weight: [offset_x | offset_y | attention logits]
        Wcat = jnp.concatenate([Woff[:, perm], Wattn], axis=1)
        bcat = jnp.concatenate([boff[perm], battn], axis=0)
        layers.append({
            "Wv": lin(kk[2], C, C), "bv": jnp.zeros((C,), jnp.float32),
            "Wcat": Wcat, "bcat": bcat,
            "Wout": lin(kk[4], C, C), "bout": jnp.zeros((C,), jnp.float32),
            "ln1_g": jnp.ones((C,), jnp.float32), "ln1_b": jnp.zeros((C,), jnp.float32),
            "ln2_g": jnp.ones((C,), jnp.float32), "ln2_b": jnp.zeros((C,), jnp.float32),
            "W1": lin(kk[5], C, d_ffn), "b1": jnp.zeros((d_ffn,), jnp.float32),
            "W2": lin(kk[6], d_ffn, C), "b2": jnp.zeros((C,), jnp.float32),
        })

    return {
        "d_model": C, "n_heads": n_heads, "n_points": n_points, "n_levels": n_levels,
        "ref_head_W": ref_head_W, "ref_head_b": ref_head_b,
        "qscale_W": qscale_W, "qscale_b": qscale_b,
        "layers": layers,
    }


# ---------------------------------------------------------------------------
# DeformableTransformerMSDecoder.forward (eval mode)
# ---------------------------------------------------------------------------
def deformable_ms_decoder_forward(params, tgt, reference_points, src, tgt_reference_points,
                                  src_spatial_shapes, src_level_start_index,
                                  tgt_spatial_shapes, tgt_level_start_index,
                                  query_pos=None, return_intermediate=False,
                                  block_m=512, block_q=128):
    # TODO(synk): tgt_reference_points / tgt_spatial_shapes / tgt_level_start_index are accepted
    #             for signature parity but unused: the externally-defined decoder layer is
    #             implemented here as deformable cross-attention into the src memory only.
    N, nq, C = tgt.shape
    n_heads = params["n_heads"]
    n_points = params["n_points"]

    spatial_shapes = tuple(tuple(int(v) for v in s) for s in src_spatial_shapes)
    assert src.shape[1] == sum(h * w for h, w in spatial_shapes)
    # level starts are recomputed from the (aligned, padded) value layout; the provided
    # src_level_start_index is only meaningful for the unpadded layout.
    src_pad, level_start_pad, level_size_pad = _pad_src_levels(src, spatial_shapes)
    Tp = src_pad.shape[1]
    col_scale = _build_col_scale(spatial_shapes, n_heads, n_points)

    output = tgt
    intermediate, intermediate_ref = [], []
    for lid, lp in enumerate(params["layers"]):
        # reference_points_input = reference_points[:, :, None]; the singleton level axis is
        # broadcast over levels inside the deformable attention, so we pass (N, nq, 2) directly.
        if query_pos is None:
            raw_query_pos = pallas_mlp(reference_points.reshape(N * nq, 2),
                                       params["ref_head_W"], params["ref_head_b"],
                                       block_m).reshape(N, nq, C)
            if lid != 0:
                pos_scale = pallas_mlp(output.reshape(N * nq, C),
                                       params["qscale_W"], params["qscale_b"],
                                       block_m).reshape(N, nq, C)
                query_pos = pos_scale * raw_query_pos
            else:
                query_pos = raw_query_pos

        # value projection over the padded multi-scale memory (token-tiled, bf16 output)
        value = pallas_linear(src_pad.reshape(N * Tp, C), lp["Wv"], lp["bv"],
                              block_m, out_dtype=jnp.bfloat16).reshape(N, Tp, C)

        # fused decoder layer (projection + deformable sampling + Wout/LN1 + FFN/LN2)
        output = pallas_decoder_layer(lp, output, query_pos, reference_points, value,
                                      col_scale, spatial_shapes, level_start_pad,
                                      level_size_pad, n_heads, n_points, block_q)

        # segment_embed is None in this module -> reference points are not refined.
        if return_intermediate:
            intermediate.append(output)
            intermediate_ref.append(reference_points)

    if return_intermediate:
        return jnp.stack(intermediate), jnp.stack(intermediate_ref)
    return output, reference_points


# ---------------------------------------------------------------------------
if __name__ == "__main__":
    # Small synthetic config
    d_model, d_ffn = 64, 128
    n_heads, n_points = 4, 4
    src_spatial_shapes = ((8, 8), (4, 4))            # 2 levels -> T = 64 + 16 = 80
    n_levels = len(src_spatial_shapes)
    num_layers = 2
    N, nq = 2, 128
    T = sum(h * w for h, w in src_spatial_shapes)

    src_level_start_index = []
    acc = 0
    for (Hl, Wl) in src_spatial_shapes:
        src_level_start_index.append(acc)
        acc += Hl * Wl
    src_level_start_index = tuple(src_level_start_index)
    tgt_spatial_shapes = ((nq, 1),)
    tgt_level_start_index = (0,)

    key = jax.random.PRNGKey(0)
    k_tgt, k_src, k_ref, k_par = jax.random.split(key, 4)

    tgt = jax.random.normal(k_tgt, (N, nq, d_model), jnp.float32)
    src = jax.random.normal(k_src, (N, T, d_model), jnp.float32)
    reference_points = jax.random.uniform(k_ref, (N, nq, 2), jnp.float32,
                                          minval=0.05, maxval=0.95)
    tgt_reference_points = reference_points   # unused; signature parity only

    params = init_params(k_par, d_model, d_ffn, n_levels, n_heads, n_points, num_layers)

    # small block sizes so the tiled / multi-block grid paths are actually exercised
    out, ref_out = deformable_ms_decoder_forward(
        params, tgt, reference_points, src, tgt_reference_points,
        src_spatial_shapes, src_level_start_index, tgt_spatial_shapes, tgt_level_start_index,
        query_pos=None, return_intermediate=False, block_m=64, block_q=64)

    out = jax.block_until_ready(out)
    assert out.shape == (N, nq, d_model)
    assert ref_out.shape == (N, nq, 2)
    assert bool(jnp.all(jnp.isfinite(out)))
    print("KERNEL_OK")
</pallas_src>

<mosaic_0001>
module attributes {stable_mosaic.version = 11 : i64} {
  func.func @kernel(%arg0: i32, %arg1: memref<64x2xf32, #tpu.memory_space<vmem>>, %arg2: memref<2x64xf32, #tpu.memory_space<vmem>>, %arg3: memref<1x64xf32, #tpu.memory_space<vmem>>, %arg4: memref<64x64xf32, #tpu.memory_space<vmem>>, %arg5: memref<1x64xf32, #tpu.memory_space<vmem>>, %arg6: memref<64x64xf32, #tpu.memory_space<vmem>>, %arg7: memref<1x64xf32, #tpu.memory_space<vmem>>, %arg8: memref<64x64xf32, #tpu.memory_space<vmem>>) attributes {dimension_semantics = [#tpu.dimension_semantics<parallel>], iteration_bounds = array<i64: 4>, scalar_prefetch = 0 : i64, scratch_operands = 0 : i64, tpu.core_type = #tpu.core_type<tc>, window_params = [{transform_indices = @transform_0, window_bounds = array<i64: 64, 2>}, {pipeline_mode = #tpu.pipeline_mode<synchronous>, transform_indices = @transform_1, window_bounds = array<i64: 2, 64>}, {pipeline_mode = #tpu.pipeline_mode<synchronous>, transform_indices = @transform_2, window_bounds = array<i64: 1, 64>}, {pipeline_mode = #tpu.pipeline_mode<synchronous>, transform_indices = @transform_3, window_bounds = array<i64: 64, 64>}, {pipeline_mode = #tpu.pipeline_mode<synchronous>, transform_indices = @transform_4, window_bounds = array<i64: 1, 64>}, {pipeline_mode = #tpu.pipeline_mode<synchronous>, transform_indices = @transform_5, window_bounds = array<i64: 64, 64>}, {pipeline_mode = #tpu.pipeline_mode<synchronous>, transform_indices = @transform_6, window_bounds = array<i64: 1, 64>}, {transform_indices = @transform_7, window_bounds = array<i64: 64, 64>}]} {
    %c0 = arith.constant 0 : index
    %c0_0 = arith.constant 0 : index
    %0 = vector.load %arg1[%c0, %c0_0] : memref<64x2xf32, #tpu.memory_space<vmem>>, vector<64x2xf32>
    %c0_1 = arith.constant 0 : index
    %c0_2 = arith.constant 0 : index
    %1 = vector.load %arg2[%c0_1, %c0_2] : memref<2x64xf32, #tpu.memory_space<vmem>>, vector<2x64xf32>
    %c0_3 = arith.constant 0 : index
    %c0_4 = arith.constant 0 : index
    %2 = vector.load %arg3[%c0_3, %c0_4] : memref<1x64xf32, #tpu.memory_space<vmem>>, vector<1x64xf32>
    %3 = vector.extract_strided_slice %0 {offsets = [0, 0], sizes = [64, 1], strides = [1, 1]} : vector<64x2xf32> to vector<64x1xf32>
    %4 = vector.extract_strided_slice %1 {offsets = [0, 0], sizes = [1, 64], strides = [1, 1]} : vector<2x64xf32> to vector<1x64xf32>
    %5 = vector.broadcast %3 : vector<64x1xf32> to vector<64x64xf32>
    %6 = vector.broadcast %4 : vector<1x64xf32> to vector<64x64xf32>
    %7 = arith.mulf %5, %6 : vector<64x64xf32>
    %8 = vector.extract_strided_slice %0 {offsets = [0, 1], sizes = [64, 1], strides = [1, 1]} : vector<64x2xf32> to vector<64x1xf32>
    %9 = vector.extract_strided_slice %1 {offsets = [1, 0], sizes = [1, 64], strides = [1, 1]} : vector<2x64xf32> to vector<1x64xf32>
    %10 = vector.broadcast %8 : vector<64x1xf32> to vector<64x64xf32>
    %11 = vector.broadcast %9 : vector<1x64xf32> to vector<64x64xf32>
    %12 = arith.mulf %10, %11 : vector<64x64xf32>
    %13 = arith.addf %7, %12 : vector<64x64xf32>
    %14 = vector.broadcast %2 : vector<1x64xf32> to vector<64x64xf32>
    %15 = arith.addf %13, %14 : vector<64x64xf32>
    %cst = arith.constant 0.000000e+00 : f32
    %16 = vector.broadcast %cst : f32 to vector<64x64xf32>
    %17 = arith.maximumf %15, %16 : vector<64x64xf32>
    %c0_5 = arith.constant 0 : index
    %c0_6 = arith.constant 0 : index
    %18 = vector.load %arg4[%c0_5, %c0_6] : memref<64x64xf32, #tpu.memory_space<vmem>>, vector<64x64xf32>
    %c0_7 = arith.constant 0 : index
    %c0_8 = arith.constant 0 : index
    %19 = vector.load %arg5[%c0_7, %c0_8] : memref<1x64xf32, #tpu.memory_space<vmem>>, vector<1x64xf32>
    %20 = arith.truncf %17 : vector<64x64xf32> to vector<64x64xbf16>
    %21 = arith.truncf %18 : vector<64x64xf32> to vector<64x64xbf16>
    %cst_9 = arith.constant dense<0.000000e+00> : vector<64x64xf32>
    %22 = tpu.matmul %20, %21, %cst_9 {dimension_numbers = #tpu.dot_dimension_numbers<[1], [0], [0], [1], [0, 0, 1, 1], [], []>} : vector<64x64xbf16>, vector<64x64xbf16>, vector<64x64xf32> -> vector<64x64xf32>
    %23 = vector.broadcast %19 : vector<1x64xf32> to vector<64x64xf32>
    %24 = arith.addf %22, %23 : vector<64x64xf32>
    %cst_10 = arith.constant 0.000000e+00 : f32
    %25 = vector.broadcast %cst_10 : f32 to vector<64x64xf32>
    %26 = arith.maximumf %24, %25 : vector<64x64xf32>
    %c0_11 = arith.constant 0 : index
    %c0_12 = arith.constant 0 : index
    %27 = vector.load %arg6[%c0_11, %c0_12] : memref<64x64xf32, #tpu.memory_space<vmem>>, vector<64x64xf32>
    %c0_13 = arith.constant 0 : index
    %c0_14 = arith.constant 0 : index
    %28 = vector.load %arg7[%c0_13, %c0_14] : memref<1x64xf32, #tpu.memory_space<vmem>>, vector<1x64xf32>
    %29 = arith.truncf %26 : vector<64x64xf32> to vector<64x64xbf16>
    %30 = arith.truncf %27 : vector<64x64xf32> to vector<64x64xbf16>
    %cst_15 = arith.constant dense<0.000000e+00> : vector<64x64xf32>
    %31 = tpu.matmul %29, %30, %cst_15 {dimension_numbers = #tpu.dot_dimension_numbers<[1], [0], [0], [1], [0, 0, 1, 1], [], []>} : vector<64x64xbf16>, vector<64x64xbf16>, vector<64x64xf32> -> vector<64x64xf32>
    %32 = vector.broadcast %28 : vector<1x64xf32> to vector<64x64xf32>
    %33 = arith.addf %31, %32 : vector<64x64xf32>
    %c0_16 = arith.constant 0 : index
    %c0_17 = arith.constant 0 : index
    %34 = vector.load %arg8[%c0_16, %c0_17] : memref<64x64xf32, #tpu.memory_space<vmem>>, vector<64x64xf32>
    tpu.vector_store %arg8[%c0_16, %c0_17], %33 {strides = array<i32>} : memref<64x64xf32, #tpu.memory_space<vmem>>, vector<64x64xf32>,
    return
  }
  func.func @transform_0(%arg0: i32) -> (i32, i32) {
    %c0_i32 = arith.constant 0 : i32
    %c0_i32_0 = arith.constant 0 : i32
    return %arg0, %c0_i32 : i32, i32
  }
  func.func @transform_1(%arg0: i32) -> (i32, i32) {
    %c0_i32 = arith.constant 0 : i32
    %c0_i32_0 = arith.constant 0 : i32
    %c0_i32_1 = arith.constant 0 : i32
    return %c0_i32, %c0_i32_0 : i32, i32
  }
  func.func @transform_2(%arg0: i32) -> (i32, i32) {
    %c0_i32 = arith.constant 0 : i32
    %c0_i32_0 = arith.constant 0 : i32
    %c0_i32_1 = arith.constant 0 : i32
    return %c0_i32, %c0_i32_0 : i32, i32
  }
  func.func @transform_3(%arg0: i32) -> (i32, i32) {
    %c0_i32 = arith.constant 0 : i32
    %c0_i32_0 = arith.constant 0 : i32
    %c0_i32_1 = arith.constant 0 : i32
    return %c0_i32, %c0_i32_0 : i32, i32
  }
  func.func @transform_4(%arg0: i32) -> (i32, i32) {
    %c0_i32 = arith.constant 0 : i32
    %c0_i32_0 = arith.constant 0 : i32
    %c0_i32_1 = arith.constant 0 : i32
    return %c0_i32, %c0_i32_0 : i32, i32
  }
  func.func @transform_5(%arg0: i32) -> (i32, i32) {
    %c0_i32 = arith.constant 0 : i32
    %c0_i32_0 = arith.constant 0 : i32
    %c0_i32_1 = arith.constant 0 : i32
    return %c0_i32, %c0_i32_0 : i32, i32
  }
  func.func @transform_6(%arg0: i32) -> (i32, i32) {
    %c0_i32 = arith.constant 0 : i32
    %c0_i32_0 = arith.constant 0 : i32
    %c0_i32_1 = arith.constant 0 : i32
    return %c0_i32, %c0_i32_0 : i32, i32
  }
  func.func @transform_7(%arg0: i32) -> (i32, i32) {
    %c0_i32 = arith.constant 0 : i32
    %c0_i32_0 = arith.constant 0 : i32
    return %arg0, %c0_i32 : i32, i32
  }
}

</mosaic_0001>

<llo_original>
// kernel: tpu_custom_call.1
$region0: #{tpu_custom_call.1}
  #allocation0 [shape = 'u32[]', space=smem, size = 0x4, offset = 0x4, fixed_abs, tag = 'smem constant byte address 0x4 - core index']
  #allocation1 [shape = 'u32[144,128]{1,0:T(1,128)}', space=vmem, size = 0x12000, scoped, tag = 'internal scratch']
  %s0 = inlined_call_operand.vmem [shape: f32[256,2], index: 0, kind: input, shape index: {}]
  %s1 = inlined_call_operand.vmem [shape: f32[2,64], index: 1, kind: input, shape index: {}]
  %s2 = inlined_call_operand.vmem [shape: f32[1,64], index: 2, kind: input, shape index: {}]
  %s3 = inlined_call_operand.vmem [shape: f32[64,64], index: 3, kind: input, shape index: {}]
  %s4 = inlined_call_operand.vmem [shape: f32[1,64], index: 4, kind: input, shape index: {}]
  %s5 = inlined_call_operand.vmem [shape: f32[64,64], index: 5, kind: input, shape index: {}]
  %s6 = inlined_call_operand.vmem [shape: f32[1,64], index: 6, kind: input, shape index: {}]
  %s7 = inlined_call_operand.vmem [shape: f32[256,64], index: 7, kind: output, shape index: {}]
  %s8 = sld [smem:[#allocation0]]
  $region61: #{tpu_custom_call.1} parent=0
    _
  %s10 = ssub.s32 1, %s8
  %s11 = scalar_select 0, %s10, %s8
  loop: start=0, step=1, limit=6
  $region2: #{tpu_custom_call.1} parent=0 // loop_pre_header
    _
  $region3: #{tpu_custom_call.1} parent=0 // loop_header
    %s13 = sphi 0, %s17
    %p14 = scmp.ge.s32.totalorder %s13, 6
    %s23 = sphi 0, %s25
    %s26 = sphi 0, %s23
    %s27 = sphi 0, %s26
    %s43 = sphi 0, %s27
    %s47 = sphi 0, %s47
    %s49 = sphi 0, %s47
    %s50 = sphi 0, %s49
    %s64 = sphi 0, %s50
    %s68 = sphi 0, %s68
    %s70 = sphi 0, %s68
    %s71 = sphi 0, %s70
    %s85 = sphi 0, %s71
    %s89 = sphi 0, %s89
    %s91 = sphi 0, %s89
    %s92 = sphi 0, %s91
    %s106 = sphi 0, %s92
    %s110 = sphi 0, %s110
    %s112 = sphi 0, %s110
    %s113 = sphi 0, %s112
    %s127 = sphi 0, %s113
    %s131 = sphi 0, %s131
    %s133 = sphi 0, %s131
    %s134 = sphi 0, %s133
    %s148 = sphi 0, %s134
    %s152 = sphi 0, %s152
    %s154 = sphi 0, %s152
    %s155 = sphi 0, %s154
    %s169 = sphi 0, %s155
    %s175 = sphi 0, %s177
    %s178 = sphi 0, %s175
    %s179 = sphi 0, %s178
    %s195 = sphi 0, %s179
  $region4: #{tpu_custom_call.1} parent=0 // loop_header_branch
    %16 = sbr.rel (%p14) target = $region8
  $region5: #{tpu_custom_call.1} parent=0 // loop_body
    %s18 = ssub.s32 %s13, 1
    %s19 = ssub.s32 %s13, 2
    %s20 = sadd.s32 %s13, 1
    %s21 = ssub.s32 %s13, %s20
    %p22 = scmp.eq.s32.totalorder %s21, 0
    %s24 = sadd.s32 %s23, 1
    %s25 = scalar_select %p22, %s23, %s24
    %p28 = pneg %p22
    %p29 = scmp.eq.s32.totalorder %s13, 3
    %p30 = por %p28, %p29
    %p31 = scmp.ne.s32.totalorder %s23, %s26
    %p32 = scmp.eq.s32.totalorder %s13, 0
    %p33 = por %p31, %p32
    %p34 = scmp.ne.s32.totalorder %s23, %s26
    %p35 = scmp.eq.s32.totalorder %s18, 3
    %p36 = por %p34, %p35
    %p37 = scmp.ne.s32.totalorder %s26, %s27
    %p38 = scmp.eq.s32.totalorder %s18, 0
    %p39 = por %p37, %p38
    %p40 = scmp.ne.s32.totalorder %s26, %s27
    %p41 = scmp.eq.s32.totalorder %s19, 3
    %p42 = por %p40, %p41
    %p44 = scmp.ne.s32.totalorder %s27, %s43
    %p45 = scmp.eq.s32.totalorder %s19, 0
    %p46 = por %p44, %p45
    %s48 = sadd.s32 %s47, 1
    %p51 = scmp.eq.s32.totalorder %s13, 3
    %p52 = scmp.ne.s32.totalorder %s47, %s49
    %p53 = scmp.eq.s32.totalorder %s13, 0
    %p54 = por %p52, %p53
    %p55 = scmp.ne.s32.totalorder %s47, %s49
    %p56 = scmp.eq.s32.totalorder %s18, 3
    %p57 = por %p55, %p56
    %p58 = scmp.ne.s32.totalorder %s49, %s50
    %p59 = scmp.eq.s32.totalorder %s18, 0
    %p60 = por %p58, %p59
    %p61 = scmp.ne.s32.totalorder %s49, %s50
    %p62 = scmp.eq.s32.totalorder %s19, 3
    %p63 = por %p61, %p62
    %p65 = scmp.ne.s32.totalorder %s50, %s64
    %p66 = scmp.eq.s32.totalorder %s19, 0
    %p67 = por %p65, %p66
    %s69 = sadd.s32 %s68, 1
    %p72 = scmp.eq.s32.totalorder %s13, 3
    %p73 = scmp.ne.s32.totalorder %s68, %s70
    %p74 = scmp.eq.s32.totalorder %s13, 0
    %p75 = por %p73, %p74
    %p76 = scmp.ne.s32.totalorder %s68, %s70
    %p77 = scmp.eq.s32.totalorder %s18, 3
    %p78 = por %p76, %p77
    %p79 = scmp.ne.s32.totalorder %s70, %s71
    %p80 = scmp.eq.s32.totalorder %s18, 0
    %p81 = por %p79, %p80
    %p82 = scmp.ne.s32.totalorder %s70, %s71
    %p83 = scmp.eq.s32.totalorder %s19, 3
    %p84 = por %p82, %p83
    %p86 = scmp.ne.s32.totalorder %s71, %s85
    %p87 = scmp.eq.s32.totalorder %s19, 0
    %p88 = por %p86, %p87
    %s90 = sadd.s32 %s89, 1
    %p93 = scmp.eq.s32.totalorder %s13, 3
    %p94 = scmp.ne.s32.totalorder %s89, %s91
    %p95 = scmp.eq.s32.totalorder %s13, 0
    %p96 = por %p94, %p95
    %p97 = scmp.ne.s32.totalorder %s89, %s91
    %p98 = scmp.eq.s32.totalorder %s18, 3
    %p99 = por %p97, %p98
    %p100 = scmp.ne.s32.totalorder %s91, %s92
    %p101 = scmp.eq.s32.totalorder %s18, 0
    %p102 = por %p100, %p101
    %p103 = scmp.ne.s32.totalorder %s91, %s92
    %p104 = scmp.eq.s32.totalorder %s19, 3
    %p105 = por %p103, %p104
    %p107 = scmp.ne.s32.totalorder %s92, %s106
    %p108 = scmp.eq.s32.totalorder %s19, 0
    %p109 = por %p107, %p108
    %s111 = sadd.s32 %s110, 1
    %p114 = scmp.eq.s32.totalorder %s13, 3
    %p115 = scmp.ne.s32.totalorder %s110, %s112
    %p116 = scmp.eq.s32.totalorder %s13, 0
    %p117 = por %p115, %p116
    %p118 = scmp.ne.s32.totalorder %s110, %s112
    %p119 = scmp.eq.s32.totalorder %s18, 3
    %p120 = por %p118, %p119
    %p121 = scmp.ne.s32.totalorder %s112, %s113
    %p122 = scmp.eq.s32.totalorder %s18, 0
    %p123 = por %p121, %p122
    %p124 = scmp.ne.s32.totalorder %s112, %s113
    %p125 = scmp.eq.s32.totalorder %s19, 3
    %p126 = por %p124, %p125
    %p128 = scmp.ne.s32.totalorder %s113, %s127
    %p129 = scmp.eq.s32.totalorder %s19, 0
    %p130 = por %p128, %p129
    %s132 = sadd.s32 %s131, 1
    %p135 = scmp.eq.s32.totalorder %s13, 3
    %p136 = scmp.ne.s32.totalorder %s131, %s133
    %p137 = scmp.eq.s32.totalorder %s13, 0
    %p138 = por %p136, %p137
    %p139 = scmp.ne.s32.totalorder %s131, %s133
    %p140 = scmp.eq.s32.totalorder %s18, 3
    %p141 = por %p139, %p140
    %p142 = scmp.ne.s32.totalorder %s133, %s134
    %p143 = scmp.eq.s32.totalorder %s18, 0
    %p144 = por %p142, %p143
    %p145 = scmp.ne.s32.totalorder %s133, %s134
    %p146 = scmp.eq.s32.totalorder %s19, 3
    %p147 = por %p145, %p146
    %p149 = scmp.ne.s32.totalorder %s134, %s148
    %p150 = scmp.eq.s32.totalorder %s19, 0
    %p151 = por %p149, %p150
    %s153 = sadd.s32 %s152, 1
    %p156 = scmp.eq.s32.totalorder %s13, 3
    %p157 = scmp.ne.s32.totalorder %s152, %s154
    %p158 = scmp.eq.s32.totalorder %s13, 0
    %p159 = por %p157, %p158
    %p160 = scmp.ne.s32.totalorder %s152, %s154
    %p161 = scmp.eq.s32.totalorder %s18, 3
    %p162 = por %p160, %p161
    %p163 = scmp.ne.s32.totalorder %s154, %s155
    %p164 = scmp.eq.s32.totalorder %s18, 0
    %p165 = por %p163, %p164
    %p166 = scmp.ne.s32.totalorder %s154, %s155
    %p167 = scmp.eq.s32.totalorder %s19, 3
    %p168 = por %p166, %p167
    %p170 = scmp.ne.s32.totalorder %s155, %s169
    %p171 = scmp.eq.s32.totalorder %s19, 0
    %p172 = por %p170, %p171
    %s173 = ssub.s32 %s13, %s20
    %p174 = scmp.eq.s32.totalorder %s173, 0
    %s176 = sadd.s32 %s175, 1
    %s177 = scalar_select %p174, %s175, %s176
    %p180 = pneg %p174
    %p181 = scmp.eq.s32.totalorder %s13, 3
    %p182 = por %p180, %p181
    %p183 = scmp.ne.s32.totalorder %s175, %s178
    %p184 = scmp.eq.s32.totalorder %s13, 0
    %p185 = por %p183, %p184
    %p186 = scmp.ne.s32.totalorder %s175, %s178
    %p187 = scmp.eq.s32.totalorder %s18, 3
    %p188 = por %p186, %p187
    %p189 = scmp.ne.s32.totalorder %s178, %s179
    %p190 = scmp.eq.s32.totalorder %s18, 0
    %p191 = por %p189, %p190
    %p192 = scmp.ne.s32.totalorder %s178, %s179
    %p193 = scmp.eq.s32.totalorder %s19, 3
    %p194 = por %p192, %p193
    %p196 = scmp.ne.s32.totalorder %s179, %s195
    %p197 = scmp.eq.s32.totalorder %s19, 0
    %p198 = por %p196, %p197
    %p199 = scmp.le.s32.totalorder 1, %s13
    %p200 = scmp.lt.s32.totalorder %s13, 5
    %p201 = pnand %p199, %p200
    %p202 = pneg %p201
    // Predicated region
    $region9: #{tpu_custom_call.1} parent=5 // pred_check
      _
    $region10: #{tpu_custom_call.1} parent=5 // pred_check_branch
      %204 = sbr.rel (%p201) target = $region12
    $region11: #{tpu_custom_call.1} parent=5 // pred_region
      %s205 = ssub.s32 %s13, 1
      // Predicated region
      $region13: #{tpu_custom_call.1} parent=11 // pred_check
        %p206 = pneg %p60
      $region14: #{tpu_custom_call.1} parent=11 // pred_check_branch
        %208 = sbr.rel (%p206) target = $region16
      $region15: #{tpu_custom_call.1} parent=11 // pred_region
        _
      $region16: #{tpu_custom_call.1} parent=11 // pred_fallthru
        _
      // Predicated region
      $region17: #{tpu_custom_call.1} parent=11 // pred_check
        %p209 = pneg %p81
      $region18: #{tpu_custom_call.1} parent=11 // pred_check_branch
        %211 = sbr.rel (%p209) target = $region20
      $region19: #{tpu_custom_call.1} parent=11 // pred_region
        _
      $region20: #{tpu_custom_call.1} parent=11 // pred_fallthru
        _
      // Predicated region
      $region21: #{tpu_custom_call.1} parent=11 // pred_check
        %p212 = pneg %p102
      $region22: #{tpu_custom_call.1} parent=11 // pred_check_branch
        %214 = sbr.rel (%p212) target = $region24
      $region23: #{tpu_custom_call.1} parent=11 // pred_region
        _
      $region24: #{tpu_custom_call.1} parent=11 // pred_fallthru
        _
      // Predicated region
      $region25: #{tpu_custom_call.1} parent=11 // pred_check
        %p215 = pneg %p123
      $region26: #{tpu_custom_call.1} parent=11 // pred_check_branch
        %217 = sbr.rel (%p215) target = $region28
      $region27: #{tpu_custom_call.1} parent=11 // pred_region
        _
      $region28: #{tpu_custom_call.1} parent=11 // pred_fallthru
        _
      // Predicated region
      $region29: #{tpu_custom_call.1} parent=11 // pred_check
        %p218 = pneg %p144
      $region30: #{tpu_custom_call.1} parent=11 // pred_check_branch
        %220 = sbr.rel (%p218) target = $region32
      $region31: #{tpu_custom_call.1} parent=11 // pred_region
        _
      $region32: #{tpu_custom_call.1} parent=11 // pred_fallthru
        _
      // Predicated region
      $region33: #{tpu_custom_call.1} parent=11 // pred_check
        %p221 = pneg %p165
      $region34: #{tpu_custom_call.1} parent=11 // pred_check_branch
        %223 = sbr.rel (%p221) target = $region36
      $region35: #{tpu_custom_call.1} parent=11 // pred_region
        _
      $region36: #{tpu_custom_call.1} parent=11 // pred_fallthru
        _
    $region12: #{tpu_custom_call.1} parent=5 // pred_fallthru
      _
    %p224 = scmp.lt.s32.totalorder %s13, 4
    // Predicated region
    $region37: #{tpu_custom_call.1} parent=5 // pred_check
      %p225 = pneg %p224
    $region38: #{tpu_custom_call.1} parent=5 // pred_check_branch
      %227 = sbr.rel (%p225) target = $region40
    $region39: #{tpu_custom_call.1} parent=5 // pred_region
      // Predicated region
      $region41: #{tpu_custom_call.1} parent=39 // pred_check
        %p228 = pneg %p33
      $region42: #{tpu_custom_call.1} parent=39 // pred_check_branch
        %230 = sbr.rel (%p228) target = $region44
      $region43: #{tpu_custom_call.1} parent=39 // pred_region
        %s231 = smul.u32 8, %s13
        %p232 = scmp.lt.s32.totalorder %s231, 31
        %s233 = scalar_select %p232, %s231, 31
        %s234 = smul.addr %s233, 8
        %s235 = scalar_lea.vmem %s0, %s234
        %s236 = smul.u32 8, %s13
      $region44: #{tpu_custom_call.1} parent=39 // pred_fallthru
        _
    $region40: #{tpu_custom_call.1} parent=5 // pred_fallthru
      _
    %p237 = scmp.le.s32.totalorder 1, %s13
    %p238 = scmp.lt.s32.totalorder %s13, 5
    %p239 = pnand %p237, %p238
    %p240 = pneg %p239
    // Predicated region
    $region45: #{tpu_custom_call.1} parent=5 // pred_check
      _
    $region46: #{tpu_custom_call.1} parent=5 // pred_check_branch
      %242 = sbr.rel (%p239) target = $region48
    $region47: #{tpu_custom_call.1} parent=5 // pred_region
      %s243 = ssub.s32 %s13, 1
      %s244 = smul.u32 8, %s18
      %p245 = scmp.lt.s32.totalorder %s244, 31
      %s246 = scalar_select %p245, %s244, 31
      %s247 = smul.addr %s246, 8
      %s248 = scalar_lea.vmem %s0, %s247
      %p249 = pneg %p39
      %p250 = pneg %p36
      %p251 = pneg %p60
      %p252 = pneg %p57
      %p253 = pneg %p81
      %p254 = pneg %p78
      %p255 = pneg %p102
      %p256 = pneg %p99
      %p257 = pneg %p123
      %p258 = pneg %p120
      %p259 = pneg %p144
      %p260 = pneg %p141
      %p261 = pneg %p165
      %p262 = pneg %p162
      %p263 = pneg %p191
      %p264 = pneg %p188
      %s265 = smul.u32 8, %s18
      %p266 = scmp.lt.s32.totalorder %s265, 31
      %s267 = scalar_select %p266, %s265, 31
      %s268 = smul.addr %s267, 8
      %s269 = scalar_lea.vmem %s7, %s268
      %s270 = smul.u32 8, %s18
      %p271 = scmp.lt.s32.totalorder %s270, 31
      %s272 = scalar_select %p271, %s270, 31
      %s273 = smul.addr %s272, 8
      %s274 = scalar_lea.vmem %s0, %s273
      %s275 = smul.u32 8, %s18
      %s276 = smul.u32 8, %s18
      %p277 = scmp.lt.s32.totalorder %s276, 31
      %s278 = scalar_select %p277, %s276, 31
      %s279 = smul.addr %s278, 8
      %s280 = scalar_lea.vmem %s7, %s279
      %s281 = smul.u32 8, %s18
      %v283 = vld [vmem:[%s274] sm:$0xff]
      %v284 = vld [vmem:[%s274 + $0x8] sm:$0xff]
      %v285 = vld [vmem:[%s274 + $0x10] sm:$0xff]
      %v286 = vld [vmem:[%s274 + $0x18] sm:$0xff]
      %v287 = vld [vmem:[%s274 + $0x20] sm:$0xff]
      %v288 = vld [vmem:[%s274 + $0x28] sm:$0xff]
      %v289 = vld [vmem:[%s274 + $0x30] sm:$0xff]
      %v290 = vld [vmem:[%s274 + $0x38] sm:$0xff]
      %v291 = vld [vmem:[%s1] sm:$0x3]
      %v292 = vld [vmem:[%s2] sm:$0x1]
      %294 = vset.pattern.permute.xlu0 0
      %295 = vperm.xlu0 %294, %v283
      %v296 = vpop.permute.xlu0 %295
      %299 = vset.pattern.permute.xlu0 0
      %300 = vperm.xlu0 %299, %v284
      %v301 = vpop.permute.xlu0 %300
      %304 = vset.pattern.permute.xlu0 0
      %305 = vperm.xlu0 %304, %v285
      %v306 = vpop.permute.xlu0 %305
      %309 = vset.pattern.permute.xlu0 0
      %310 = vperm.xlu0 %309, %v286
      %v311 = vpop.permute.xlu0 %310
      %314 = vset.pattern.permute.xlu0 0
      %315 = vperm.xlu0 %314, %v287
      %v316 = vpop.permute.xlu0 %315
      %319 = vset.pattern.permute.xlu0 0
      %320 = vperm.xlu0 %319, %v288
      %v321 = vpop.permute.xlu0 %320
      %324 = vset.pattern.permute.xlu0 0
      %325 = vperm.xlu0 %324, %v289
      %v326 = vpop.permute.xlu0 %325
      %329 = vset.pattern.permute.xlu0 0
      %330 = vperm.xlu0 %329, %v290
      %v331 = vpop.permute.xlu0 %330
      %v333 = vlaneseq
      %v334 = vshrl.u32 %v333, 7
      %v335 = vsub.s32 0, %v334
      %v336 = vrot.slane %v291, %v335
      %v337 = vmul.f32 %v296, %v336
      %v338 = vmul.f32 %v301, %v336
      %v339 = vmul.f32 %v306, %v336
      %v340 = vmul.f32 %v311, %v336
      %v341 = vmul.f32 %v316, %v336
      %v342 = vmul.f32 %v321, %v336
      %v343 = vmul.f32 %v326, %v336
      %v344 = vmul.f32 %v331, %v336
      %345 = vset.pattern.permute.xlu0 1
      %346 = vperm.xlu0 %345, %v283
      %v347 = vpop.permute.xlu0 %346
      %349 = vset.pattern.permute.xlu0 1
      %350 = vperm.xlu0 %349, %v284
      %v351 = vpop.permute.xlu0 %350
      %353 = vset.pattern.permute.xlu0 1
      %354 = vperm.xlu0 %353, %v285
      %v355 = vpop.permute.xlu0 %354
      %357 = vset.pattern.permute.xlu0 1
      %358 = vperm.xlu0 %357, %v286
      %v359 = vpop.permute.xlu0 %358
      %361 = vset.pattern.permute.xlu0 1
      %362 = vperm.xlu0 %361, %v287
      %v363 = vpop.permute.xlu0 %362
      %365 = vset.pattern.permute.xlu0 1
      %366 = vperm.xlu0 %365, %v288
      %v367 = vpop.permute.xlu0 %366
      %369 = vset.pattern.permute.xlu0 1
      %370 = vperm.xlu0 %369, %v289
      %v371 = vpop.permute.xlu0 %370
      %373 = vset.pattern.permute.xlu0 1
      %374 = vperm.xlu0 %373, %v290
      %v375 = vpop.permute.xlu0 %374
      %v377 = vlaneseq
      %v378 = vshrl.u32 %v377, 7
      %v379 = vsub.s32 1, %v378
      %v380 = vrot.slane %v291, %v379
      %v381 = vmul.f32 %v347, %v380
      %v382 = vmul.f32 %v351, %v380
      %v383 = vmul.f32 %v355, %v380
      %v384 = vmul.f32 %v359, %v380
      %v385 = vmul.f32 %v363, %v380
      %v386 = vmul.f32 %v367, %v380
      %v387 = vmul.f32 %v371, %v380
      %v388 = vmul.f32 %v375, %v380
      %v389 = vadd.f32 %v337, %v381
      %v390 = vadd.f32 %v338, %v382
      %v391 = vadd.f32 %v339, %v383
      %v392 = vadd.f32 %v340, %v384
      %v393 = vadd.f32 %v341, %v385
      %v394 = vadd.f32 %v342, %v386
      %v395 = vadd.f32 %v343, %v387
      %v396 = vadd.f32 %v344, %v388
      %v398 = vlaneseq
      %v399 = vshrl.u32 %v398, 7
      %v400 = vsub.s32 0, %v399
      %v401 = vrot.slane %v292, %v400
      %v403 = vadd.f32 %v389, %v401
      %v404 = vadd.f32 %v390, %v401
      %v405 = vadd.f32 %v391, %v401
      %v406 = vadd.f32 %v392, %v401
      %v407 = vadd.f32 %v393, %v401
      %v408 = vadd.f32 %v394, %v401
      %v409 = vadd.f32 %v395, %v401
      %v410 = vadd.f32 %v396, %v401
      %v411 = vmax.f32 %v403, 0.0
      %v412 = vmax.f32 %v404, 0.0
      %v413 = vmax.f32 %v405, 0.0
      %v414 = vmax.f32 %v406, 0.0
      %v415 = vmax.f32 %v407, 0.0
      %v416 = vmax.f32 %v408, 0.0
      %v417 = vmax.f32 %v409, 0.0
      %v418 = vmax.f32 %v410, 0.0
      %v419 = vld [vmem:[%s3] sm:$0xff]
      %v420 = vld [vmem:[%s3 + $0x8] sm:$0xff]
      %v421 = vld [vmem:[%s3 + $0x10] sm:$0xff]
      %v422 = vld [vmem:[%s3 + $0x18] sm:$0xff]
      %v423 = vld [vmem:[%s3 + $0x20] sm:$0xff]
      %v424 = vld [vmem:[%s3 + $0x28] sm:$0xff]
      %v425 = vld [vmem:[%s3 + $0x30] sm:$0xff]
      %v426 = vld [vmem:[%s3 + $0x38] sm:$0xff]
      %v427 = vld [vmem:[%s4] sm:$0x1]
      %v428 = vpack.c.bf16 %v412, %v411
      %v429 = vpack.c.bf16 %v414, %v413
      %v430 = vpack.c.bf16 %v416, %v415
      %v431 = vpack.c.bf16 %v418, %v417
      %v432 = vpack.c.bf16 %v420, %v419
      %v433 = vpack.c.bf16 %v422, %v421
      %v434 = vpack.c.bf16 %v424, %v423
      %v435 = vpack.c.bf16 %v426, %v425
      %v437 = vlaneseq
      %v438 = vshrl.u32 %v437, 7
      %v439 = vsub.s32 0, %v438
      %v440 = vrot.slane %v427, %v439
      %vm442 = vcmask 523264
      %v444 = vsel %vm442, %v428, 0
      %v447 = vsel %vm442, %v429, 0
      %v450 = vsel %vm442, %v430, 0
      %v453 = vsel %vm442, %v431, 0
      %455 = vmatprep.subr.bf16.mxu0 0
      %456 = vmatpush1.bf16.msra.mxu0 %v432
      %457 = vmatprep.subr.bf16.mxu0 0
      %458 = vmatpush1.bf16.msra.mxu0 %v433
      %459 = vmatprep.subr.bf16.mxu0 0
      %460 = vmatpush1.bf16.msra.mxu0 %v434
      %461 = vmatprep.subr.bf16.mxu0 0
      %462 = vmatpush1.bf16.msra.mxu0 %v435
      %463 = vmatprep.subr.bf16.mxu0 0
      %464 = vmatpush1.bf16.msra.mxu0 0
      %465 = vmatprep.subr.bf16.mxu0 0
      %466 = vmatpush1.bf16.msra.mxu0 0
      %467 = vmatprep.subr.bf16.mxu0 0
      %468 = vmatpush1.bf16.msra.mxu0 0
      %469 = vmatprep.subr.bf16.mxu0 0
      %470 = vmatpush1.bf16.msra.mxu0 0
      %471 = vmatprep.subr.bf16.mxu0 0
      %472 = vmatpush1.bf16.msra.mxu0 0
      %473 = vmatprep.subr.bf16.mxu0 0
      %474 = vmatpush1.bf16.msra.mxu0 0
      %475 = vmatprep.subr.bf16.mxu0 0
      %476 = vmatpush1.bf16.msra.mxu0 0
      %477 = vmatprep.subr.bf16.mxu0 0
      %478 = vmatpush1.bf16.msra.mxu0 0
      %479 = vmatprep.subr.bf16.mxu0 0
      %480 = vmatpush1.bf16.msra.mxu0 0
      %481 = vmatprep.subr.bf16.mxu0 0
      %482 = vmatpush1.bf16.msra.mxu0 0
      %483 = vmatprep.subr.bf16.mxu0 0
      %484 = vmatpush1.bf16.msra.mxu0 0
      %485 = vmatprep.subr.bf16.mxu0 0
      %486 = vmatpush1.bf16.msra.mxu0 0
      %487 = vmatprep.mubr.bf16.mxu0 0
      %488 = vmatmul.mubr.bf16.gmra.mrb[0].mxu0 %v444
      %v489 = vpop.f32.mrb[0].mxu0
      %v490 = vadd.f32 %v440, %v489
      %v491 = vpop.f32.mrb[0].mxu0
      %v492 = vpop.f32.mrb[0].mxu0
      %v493 = vadd.f32 %v440, %v492
      %v494 = vpop.f32.mrb[0].mxu0
      %495 = vmatprep.mubr.bf16.mxu0 0
      %496 = vmatmul.mubr.bf16.gmra.mrb[0].mxu0 %v447
      %v497 = vpop.f32.mrb[0].mxu0
      %v498 = vadd.f32 %v440, %v497
      %v499 = vpop.f32.mrb[0].mxu0
      %v500 = vpop.f32.mrb[0].mxu0
      %v501 = vadd.f32 %v440, %v500
      %v502 = vpop.f32.mrb[0].mxu0
      %503 = vmatprep.mubr.bf16.mxu0 0
      %504 = vmatmul.mubr.bf16.gmra.mrb[0].mxu0 %v450
      %v505 = vpop.f32.mrb[0].mxu0
      %v506 = vadd.f32 %v440, %v505
      %v507 = vpop.f32.mrb[0].mxu0
      %v508 = vpop.f32.mrb[0].mxu0
      %v509 = vadd.f32 %v440, %v508
      %v510 = vpop.f32.mrb[0].mxu0
      %511 = vmatprep.mubr.bf16.mxu0 0
      %512 = vmatmul.mubr.bf16.gmra.mrb[0].mxu0 %v453
      %v513 = vpop.f32.mrb[0].mxu0
      %v514 = vadd.f32 %v440, %v513
      %v515 = vpop.f32.mrb[0].mxu0
      %v516 = vpop.f32.mrb[0].mxu0
      %v517 = vadd.f32 %v440, %v516
      %v518 = vpop.f32.mrb[0].mxu0
      %519 = vdwg.mxu0
      %v520 = vmax.f32 %v490, 0.0
      %v521 = vmax.f32 %v493, 0.0
      %v522 = vmax.f32 %v498, 0.0
      %v523 = vmax.f32 %v501, 0.0
      %v524 = vmax.f32 %v506, 0.0
      %v525 = vmax.f32 %v509, 0.0
      %v526 = vmax.f32 %v514, 0.0
      %v527 = vmax.f32 %v517, 0.0
      %v528 = vld [vmem:[%s5] sm:$0xff]
      %v529 = vld [vmem:[%s5 + $0x8] sm:$0xff]
      %v530 = vld [vmem:[%s5 + $0x10] sm:$0xff]
      %v531 = vld [vmem:[%s5 + $0x18] sm:$0xff]
      %v532 = vld [vmem:[%s5 + $0x20] sm:$0xff]
      %v533 = vld [vmem:[%s5 + $0x28] sm:$0xff]
      %v534 = vld [vmem:[%s5 + $0x30] sm:$0xff]
      %v535 = vld [vmem:[%s5 + $0x38] sm:$0xff]
      %v536 = vld [vmem:[%s6] sm:$0x1]
      %v537 = vpack.c.bf16 %v521, %v520
      %v538 = vpack.c.bf16 %v523, %v522
      %v539 = vpack.c.bf16 %v525, %v524
      %v540 = vpack.c.bf16 %v527, %v526
      %v541 = vpack.c.bf16 %v529, %v528
      %v542 = vpack.c.bf16 %v531, %v530
      %v543 = vpack.c.bf16 %v533, %v532
      %v544 = vpack.c.bf16 %v535, %v534
      %v546 = vlaneseq
      %v547 = vshrl.u32 %v546, 7
      %v548 = vsub.s32 0, %v547
      %v549 = vrot.slane %v536, %v548
      %v552 = vsel %vm442, %v537, 0
      %v555 = vsel %vm442, %v538, 0
      %v558 = vsel %vm442, %v539, 0
      %v561 = vsel %vm442, %v540, 0
      %563 = vmatprep.subr.bf16.mxu0 0
      %564 = vmatpush1.bf16.msra.mxu0 %v541
      %565 = vmatprep.subr.bf16.mxu0 0
      %566 = vmatpush1.bf16.msra.mxu0 %v542
      %567 = vmatprep.subr.bf16.mxu0 0
      %568 = vmatpush1.bf16.msra.mxu0 %v543
      %569 = vmatprep.subr.bf16.mxu0 0
      %570 = vmatpush1.bf16.msra.mxu0 %v544
      %571 = vmatprep.subr.bf16.mxu0 0
      %572 = vmatpush1.bf16.msra.mxu0 0
      %573 = vmatprep.subr.bf16.mxu0 0
      %574 = vmatpush1.bf16.msra.mxu0 0
      %575 = vmatprep.subr.bf16.mxu0 0
      %576 = vmatpush1.bf16.msra.mxu0 0
      %577 = vmatprep.subr.bf16.mxu0 0
      %578 = vmatpush1.bf16.msra.mxu0 0
      %579 = vmatprep.subr.bf16.mxu0 0
      %580 = vmatpush1.bf16.msra.mxu0 0
      %581 = vmatprep.subr.bf16.mxu0 0
      %582 = vmatpush1.bf16.msra.mxu0 0
      %583 = vmatprep.subr.bf16.mxu0 0
      %584 = vmatpush1.bf16.msra.mxu0 0
      %585 = vmatprep.subr.bf16.mxu0 0
      %586 = vmatpush1.bf16.msra.mxu0 0
      %587 = vmatprep.subr.bf16.mxu0 0
      %588 = vmatpush1.bf16.msra.mxu0 0
      %589 = vmatprep.subr.bf16.mxu0 0
      %590 = vmatpush1.bf16.msra.mxu0 0
      %591 = vmatprep.subr.bf16.mxu0 0
      %592 = vmatpush1.bf16.msra.mxu0 0
      %593 = vmatprep.subr.bf16.mxu0 0
      %594 = vmatpush1.bf16.msra.mxu0 0
      %595 = vmatprep.mubr.bf16.mxu0 0
      %596 = vmatmul.mubr.bf16.gmra.mrb[0].mxu0 %v552
      %v597 = vpop.f32.mrb[0].mxu0
      %v598 = vadd.f32 %v549, %v597
      %v599 = vpop.f32.mrb[0].mxu0
      %v600 = vpop.f32.mrb[0].mxu0
      %v601 = vadd.f32 %v549, %v600
      %v602 = vpop.f32.mrb[0].mxu0
      %603 = vmatprep.mubr.bf16.mxu0 0
      %604 = vmatmul.mubr.bf16.gmra.mrb[0].mxu0 %v555
      %v605 = vpop.f32.mrb[0].mxu0
      %v606 = vadd.f32 %v549, %v605
      %v607 = vpop.f32.mrb[0].mxu0
      %v608 = vpop.f32.mrb[0].mxu0
      %v609 = vadd.f32 %v549, %v608
      %v610 = vpop.f32.mrb[0].mxu0
      %611 = vmatprep.mubr.bf16.mxu0 0
      %612 = vmatmul.mubr.bf16.gmra.mrb[0].mxu0 %v558
      %v613 = vpop.f32.mrb[0].mxu0
      %v614 = vadd.f32 %v549, %v613
      %v615 = vpop.f32.mrb[0].mxu0
      %v616 = vpop.f32.mrb[0].mxu0
      %v617 = vadd.f32 %v549, %v616
      %v618 = vpop.f32.mrb[0].mxu0
      %619 = vmatprep.mubr.bf16.mxu0 0
      %620 = vmatmul.mubr.bf16.gmra.mrb[0].mxu0 %v561
      %v621 = vpop.f32.mrb[0].mxu0
      %v622 = vadd.f32 %v549, %v621
      %v623 = vpop.f32.mrb[0].mxu0
      %v624 = vpop.f32.mrb[0].mxu0
      %v625 = vadd.f32 %v549, %v624
      %v626 = vpop.f32.mrb[0].mxu0
      %627 = vdwg.mxu0
      %628 = vst.msk [vmem:[%s280] sm:$0xff] %vm442, %v598
      %629 = vst.msk [vmem:[%s280 + $0x8] sm:$0xff] %vm442, %v601
      %630 = vst.msk [vmem:[%s280 + $0x10] sm:$0xff] %vm442, %v606
      %631 = vst.msk [vmem:[%s280 + $0x18] sm:$0xff] %vm442, %v609
      %632 = vst.msk [vmem:[%s280 + $0x20] sm:$0xff] %vm442, %v614
      %633 = vst.msk [vmem:[%s280 + $0x28] sm:$0xff] %vm442, %v617
      %634 = vst.msk [vmem:[%s280 + $0x30] sm:$0xff] %vm442, %v622
      %635 = vst.msk [vmem:[%s280 + $0x38] sm:$0xff] %vm442, %v625
      %s636 = smul.u32 8, %s18
      %p637 = scmp.lt.s32.totalorder %s636, 31
      %s638 = scalar_select %p637, %s636, 31
      %s639 = smul.addr %s638, 8
      %s640 = scalar_lea.vmem %s7, %s639
      // Predicated region
      $region49: #{tpu_custom_call.1} parent=47 // pred_check
        %p641 = pneg %p188
      $region50: #{tpu_custom_call.1} parent=47 // pred_check_branch
        %643 = sbr.rel (%p641) target = $region52
      $region51: #{tpu_custom_call.1} parent=47 // pred_region
        %s644 = smul.u32 8, %s18
      $region52: #{tpu_custom_call.1} parent=47 // pred_fallthru
        _
    $region48: #{tpu_custom_call.1} parent=5 // pred_fallthru
      _
    %p645 = scmp.le.s32.totalorder 2, %s13
    // Predicated region
    $region53: #{tpu_custom_call.1} parent=5 // pred_check
      %p646 = pneg %p645
    $region54: #{tpu_custom_call.1} parent=5 // pred_check_branch
      %648 = sbr.rel (%p646) target = $region56
    $region55: #{tpu_custom_call.1} parent=5 // pred_region
      %s649 = ssub.s32 %s13, 2
      // Predicated region
      $region57: #{tpu_custom_call.1} parent=55 // pred_check
        %p650 = pneg %p194
      $region58: #{tpu_custom_call.1} parent=55 // pred_check_branch
        %652 = sbr.rel (%p650) target = $region60
      $region59: #{tpu_custom_call.1} parent=55 // pred_region
        %s653 = smul.u32 8, %s19
        %p654 = scmp.lt.s32.totalorder %s653, 31
        %s655 = scalar_select %p654, %s653, 31
        %s656 = smul.addr %s655, 8
        %s657 = scalar_lea.vmem %s7, %s656
      $region60: #{tpu_custom_call.1} parent=55 // pred_fallthru
        _
    $region56: #{tpu_custom_call.1} parent=5 // pred_fallthru
      _
  $region6: #{tpu_custom_call.1} parent=0 // loop_footer
    %s17 = sadd.s32 1, %s13
  $region7: #{tpu_custom_call.1} parent=0 // loop_footer_branch
    %12 = sbr.rel target = $region3
  $region8: #{tpu_custom_call.1} parent=0 // loop_exit
    _

</llo_original>
